<compile_context>
chip_gen: v7x
topology: tpu7x:2x2x1
jax: 0.10.0
libtpu: 0.0.40
codegen_flags: <defaults>
</compile_context>

<pallas_src>
import math
import jax
import jax.numpy as jnp
from jax.experimental import pallas as pl
from jax.experimental.pallas import tpu as pltpu


def _round_up(x, m):
    return ((x + m - 1) // m) * m


def _vmem_capacity_bytes():
    try:
        return int(pltpu.get_tpu_info().vmem_capacity_bytes)
    except Exception:
        return 128 * 2 ** 20  # v5e/v6e default


# ---------------------------------------------------------------------------
# Pass 1: hidden tile (bf16) + online-softmax stats over vocab tiles.
#   grid = (num_token_tiles, num_vocab_tiles), vocab innermost ("arbitrary").
#   x:   (tm, H)   f32/bf16 token tile (cast to bf16 in-kernel)
#   w1:  (H, E)    bf16, resident whole in VMEM
#   b1:  (1, E)    f32,  resident whole in VMEM
#   w2:  (E, tn)   bf16 vocab tile
#   b2:  (1, tn)   f32  vocab tile (padded cols = -1e30)
#   h:   (tm, E)   bf16 output (resident across vocab axis, also reused as
#                  the operand of the second matmul)
#   lse: (tm, 1)   f32 per-row logsumexp, written at the last vocab step
# ---------------------------------------------------------------------------
def _stats_kernel(x_ref, w1_ref, b1_ref, w2_ref, b2_ref,
                  h_ref, lse_ref, m_sc, l_sc):
    j = pl.program_id(1)

    @pl.when(j == 0)
    def _():
        h = jnp.dot(x_ref[...].astype(jnp.bfloat16), w1_ref[...],
                    preferred_element_type=jnp.float32)
        h = h + b1_ref[...]
        h = jnp.maximum(h, 0.01 * h)           # LeakyReLU (slope 0.01)
        h_ref[...] = h.astype(jnp.bfloat16)
        m_sc[...] = jnp.full_like(m_sc, -jnp.inf)
        l_sc[...] = jnp.zeros_like(l_sc)

    logits = jnp.dot(h_ref[...], w2_ref[...],
                     preferred_element_type=jnp.float32) + b2_ref[...]
    m_prev = m_sc[...]
    m_new = jnp.maximum(m_prev, jnp.max(logits, axis=-1, keepdims=True))
    l_sc[...] = (jnp.exp(m_prev - m_new) * l_sc[...]
                 + jnp.sum(jnp.exp(logits - m_new), axis=-1, keepdims=True))
    m_sc[...] = m_new

    @pl.when(j == pl.num_programs(1) - 1)
    def _():
        lse_ref[...] = m_sc[...] + jnp.log(l_sc[...])


# ---------------------------------------------------------------------------
# Pass 2: probabilities.  grid = (num_vocab_tiles, num_token_tiles) so the
# W2 / b2 tile stays constant over the inner token axis and is DMA'd once.
# ---------------------------------------------------------------------------
def _probs_kernel(h_ref, lse_ref, w2_ref, b2_ref, o_ref):
    logits = jnp.dot(h_ref[...], w2_ref[...],
                     preferred_element_type=jnp.float32) + b2_ref[...]
    o_ref[...] = jnp.exp(logits - lse_ref[...]).astype(o_ref.dtype)


# ---------------------------------------------------------------------------
# One-time parameter preparation (hoisted out of the per-call wrapper):
# transpose PyTorch (out,in) weights to (in,out), cast to bf16, pad the vocab
# dimension to a multiple of the vocab tile (padded logits get bias -1e30 so
# they contribute ~0 to the softmax and are sliced off afterwards).
# ---------------------------------------------------------------------------
def prepare_generator_params(w1, b1, w2, b2, *, tn=2048):
    w1_t = jnp.asarray(w1, jnp.float32).T.astype(jnp.bfloat16)   # (H, E)
    w2_t = jnp.asarray(w2, jnp.float32).T                        # (E, V)
    E, V = w2_t.shape
    tn = int(min(tn, _round_up(V, 128)))
    v_pad = _round_up(V, tn)
    b2_row = jnp.asarray(b2, jnp.float32).reshape(1, V)
    if v_pad != V:
        w2_t = jnp.pad(w2_t, ((0, 0), (0, v_pad - V)))
        b2_row = jnp.pad(b2_row, ((0, 0), (0, v_pad - V)),
                         constant_values=-1e30)
    return {
        "w1_t": w1_t,
        "b1": jnp.asarray(b1, jnp.float32).reshape(1, -1),
        "w2_t": w2_t.astype(jnp.bfloat16),
        "b2": b2_row,
        "tn": tn,
        "vocab_size": int(V),
    }


def generator_pallas(x, params, *, tm=None, out_dtype=jnp.bfloat16):
    """x: (M, H) float. Returns (M, V) softmax probs in `out_dtype`."""
    M, H = x.shape
    w1_t, b1 = params["w1_t"], params["b1"]
    w2_t, b2 = params["w2_t"], params["b2"]
    tn, V = params["tn"], params["vocab_size"]
    E, Vp = w2_t.shape

    cap = _vmem_capacity_bytes()
    if tm is None:
        tm = 512 if cap >= 100 * 2 ** 20 else 256   # v5e/v6e vs v7x

    # bf16 packs 2 rows per sublane -> keep tm a multiple of 16.
    tm = max(16, min(tm, _round_up(M, 16)))
    # Prefer >=2 token grid steps (v7x megacore) when there is enough work.
    if _round_up(M, tm) // tm < 2 and _round_up(M, 16) >= 32:
        tm = max(16, _round_up((_round_up(M, 16) + 1) // 2, 16))
    m_pad = _round_up(M, tm)
    if m_pad != M:
        x = jnp.pad(x, ((0, m_pad - M), (0, 0)))

    nt = m_pad // tm
    nv = Vp // tn
    out_itemsize = jnp.dtype(out_dtype).itemsize
    x_itemsize = jnp.dtype(x.dtype).itemsize

    # VMEM estimate for the heavier of the two kernels; 2x headroom, capped at
    # ~85% of this generation's physical per-core VMEM.
    est1 = (H * E * 2 + E * 4                    # resident W1 / b1
            + 2 * tm * H * x_itemsize            # x tiles (double-buffered)
            + 2 * E * tn * 2 + 2 * tn * 4        # W2 / b2 tiles
            + 2 * tm * E * 2 + 2 * tm * 4        # h / lse outputs
            + 2 * tm * 4                         # m / l scratch
            + 3 * tm * tn * 4)                   # f32 logits / exp temps
    est2 = (2 * tm * E * 2 + 2 * tm * 4
            + 2 * E * tn * 2 + 2 * tn * 4
            + 2 * tm * tn * out_itemsize
            + 2 * tm * tn * 4)
    vmem_limit = int(min(int(cap * 0.85),
                         max(32 * 2 ** 20, 2 * max(est1, est2))))

    # ---- pass 1: bf16 hidden tiles + per-row logsumexp ----------------------
    h_bf, lse = pl.pallas_call(
        _stats_kernel,
        out_shape=(jax.ShapeDtypeStruct((m_pad, E), jnp.bfloat16),
                   jax.ShapeDtypeStruct((m_pad, 1), jnp.float32)),
        grid_spec=pltpu.PrefetchScalarGridSpec(
            num_scalar_prefetch=0,
            grid=(nt, nv),
            in_specs=[
                pl.BlockSpec((tm, H), lambda i, j: (i, 0)),
                pl.BlockSpec(memory_space=pltpu.MemorySpace.VMEM),  # W1^T
                pl.BlockSpec(memory_space=pltpu.MemorySpace.VMEM),  # b1
                pl.BlockSpec((E, tn), lambda i, j: (0, j)),
                pl.BlockSpec((1, tn), lambda i, j: (0, j)),
            ],
            out_specs=(
                pl.BlockSpec((tm, E), lambda i, j: (i, 0)),
                pl.BlockSpec((tm, 1), lambda i, j: (i, 0)),
            ),
            scratch_shapes=[pltpu.VMEM((tm, 1), jnp.float32),
                            pltpu.VMEM((tm, 1), jnp.float32)],
        ),
        compiler_params=pltpu.CompilerParams(
            dimension_semantics=("parallel", "arbitrary"),
            vmem_limit_bytes=vmem_limit,
        ),
    )(x, w1_t, b1, w2_t, b2)

    # ---- pass 2: exact probabilities exp(logit - lse) -----------------------
    probs = pl.pallas_call(
        _probs_kernel,
        out_shape=jax.ShapeDtypeStruct((m_pad, Vp), out_dtype),
        grid_spec=pltpu.PrefetchScalarGridSpec(
            num_scalar_prefetch=0,
            grid=(nv, nt),          # vocab outer -> each W2 tile DMA'd once
            in_specs=[
                pl.BlockSpec((tm, E), lambda j, i: (i, 0)),
                pl.BlockSpec((tm, 1), lambda j, i: (i, 0)),
                pl.BlockSpec((E, tn), lambda j, i: (0, j)),
                pl.BlockSpec((1, tn), lambda j, i: (0, j)),
            ],
            out_specs=pl.BlockSpec((tm, tn), lambda j, i: (i, j)),
        ),
        compiler_params=pltpu.CompilerParams(
            dimension_semantics=("parallel", "parallel"),
            vmem_limit_bytes=vmem_limit,
        ),
    )(h_bf, lse, w2_t, b2)

    return probs[:M, :V]


# ---------------------------------------------------------------------------
# Deterministic parameter init (xavier_uniform_, as in the module __init__)
# ---------------------------------------------------------------------------
def xavier_uniform(key, fan_in, fan_out):
    bound = math.sqrt(6.0 / (fan_in + fan_out))
    # PyTorch Linear convention (out, in); transposed in prepare_generator_params
    return jax.random.uniform(key, (fan_out, fan_in), jnp.float32, -bound, bound)


def ertsumgraph_generator_forward(dec_hidden, params, *, out_dtype=jnp.bfloat16):
    """Glue: flatten (B, T, H) -> (B*T, H), run fused kernels, reshape back."""
    B, T, H = dec_hidden.shape
    x = dec_hidden.reshape(B * T, H)
    probs = generator_pallas(x, params, out_dtype=out_dtype)
    return probs.reshape(B, T, -1)


# TODO(synk): EMEncoder / TgtTransformerEncoder / Sin_TransformerDecoder /
# Hier_TransformerDecoder are not defined in the provided source, so
# ERTSumGraph.forward's encoder/decoder stages cannot be reproduced; only the
# generator head is implemented here.


if __name__ == "__main__":
    # small shapes consistent with the module's generator:
    #   dec_hidden_size = 32, emb_size = 32, vocab_size = 128
    B, T = 2, 8
    DEC_HIDDEN = 32
    EMB = 32
    VOCAB = 128

    key = jax.random.PRNGKey(0)
    k_x, k_w1, k_w2 = jax.random.split(key, 3)

    # synthetic decoder hidden states (stand-in for decoder output)
    dec_hidden = jax.random.normal(k_x, (B, T, DEC_HIDDEN), jnp.float32)

    # generator parameters (xavier_uniform weights, zero biases — matches the
    # module's init loop which xavier-initializes all params with dim > 1)
    w1 = xavier_uniform(k_w1, DEC_HIDDEN, EMB)       # (EMB, DEC_HIDDEN)
    w2 = xavier_uniform(k_w2, EMB, VOCAB)            # (VOCAB, EMB)
    b1 = jnp.zeros((EMB,), jnp.float32)
    b2 = jnp.zeros((VOCAB,), jnp.float32)

    params = prepare_generator_params(w1, b1, w2, b2)   # one-time bf16 prep

    out = ertsumgraph_generator_forward(dec_hidden, params)
    out = jax.block_until_ready(out)

    # reference check in plain JAX (f32 everywhere); tolerances cover bf16
    # matmul inputs and the bf16 output quantization.
    x_flat = dec_hidden.reshape(B * T, DEC_HIDDEN)
    h_ref = x_flat @ jnp.transpose(w1) + b1
    h_ref = jnp.maximum(h_ref, 0.01 * h_ref)
    logits_ref = h_ref @ jnp.transpose(w2) + b2
    probs_ref = jax.nn.softmax(logits_ref, axis=-1).reshape(B, T, VOCAB)

    out_f32 = out.astype(jnp.float32)
    assert out.shape == (B, T, VOCAB)
    assert jnp.allclose(out_f32, probs_ref, atol=1e-2, rtol=0.0)
    assert jnp.allclose(jnp.sum(out_f32, axis=-1), 1.0, atol=5e-3)

    print("KERNEL_OK")
</pallas_src>

<mosaic_0001>
module attributes {stable_mosaic.version = 11 : i64} {
  func.func @_stats_kernel(%arg0: i32, %arg1: i32, %arg2: memref<16x32xf32, #tpu.memory_space<vmem>>, %arg3: memref<32x32xbf16, #tpu.memory_space<vmem>>, %arg4: memref<1x32xf32, #tpu.memory_space<vmem>>, %arg5: memref<32x128xbf16, #tpu.memory_space<vmem>>, %arg6: memref<1x128xf32, #tpu.memory_space<vmem>>, %arg7: memref<16x32xbf16, #tpu.memory_space<vmem>>, %arg8: memref<16x1xf32, #tpu.memory_space<vmem>>, %arg9: memref<16x1xf32, #tpu.memory_space<vmem>>, %arg10: memref<16x1xf32, #tpu.memory_space<vmem>>) attributes {dimension_semantics = [#tpu.dimension_semantics<parallel>, #tpu.dimension_semantics<arbitrary>], iteration_bounds = array<i64: 1, 1>, scalar_prefetch = 0 : i64, scratch_operands = 2 : i64, tpu.core_type = #tpu.core_type<tc>, window_params = [{transform_indices = @transform_0, window_bounds = array<i64: 16, 32>}, {pipeline_mode = #tpu.pipeline_mode<synchronous>, transform_indices = @transform_1, window_bounds = array<i64: 32, 32>}, {pipeline_mode = #tpu.pipeline_mode<synchronous>, transform_indices = @transform_2, window_bounds = array<i64: 1, 32>}, {transform_indices = @transform_3, window_bounds = array<i64: 32, 128>}, {transform_indices = @transform_4, window_bounds = array<i64: 1, 128>}, {transform_indices = @transform_5, window_bounds = array<i64: 16, 32>}, {transform_indices = @transform_6, window_bounds = array<i64: 16, 1>}]} {
    %c0_i32 = arith.constant 0 : i32
    %0 = arith.cmpi eq, %arg1, %c0_i32 : i32
    %1 = arith.extui %0 : i1 to i32
    %c0_i32_0 = arith.constant 0 : i32
    %2 = arith.cmpi ne, %1, %c0_i32_0 : i32
    scf.if %2 {
      %c0_18 = arith.constant 0 : index
      %c0_19 = arith.constant 0 : index
      %28 = vector.load %arg2[%c0_18, %c0_19] : memref<16x32xf32, #tpu.memory_space<vmem>>, vector<16x32xf32>
      %29 = arith.truncf %28 : vector<16x32xf32> to vector<16x32xbf16>
      %c0_20 = arith.constant 0 : index
      %c0_21 = arith.constant 0 : index
      %30 = vector.load %arg3[%c0_20, %c0_21] : memref<32x32xbf16, #tpu.memory_space<vmem>>, vector<32x32xbf16>
      %cst_22 = arith.constant dense<0.000000e+00> : vector<16x32xf32>
      %31 = tpu.matmul %29, %30, %cst_22 {dimension_numbers = #tpu.dot_dimension_numbers<[1], [0], [0], [1], [0, 0, 1, 1], [], []>} : vector<16x32xbf16>, vector<32x32xbf16>, vector<16x32xf32> -> vector<16x32xf32>
      %c0_23 = arith.constant 0 : index
      %c0_24 = arith.constant 0 : index
      %32 = vector.load %arg4[%c0_23, %c0_24] : memref<1x32xf32, #tpu.memory_space<vmem>>, vector<1x32xf32>
      %33 = vector.broadcast %32 : vector<1x32xf32> to vector<16x32xf32>
      %34 = arith.addf %31, %33 : vector<16x32xf32>
      %cst_25 = arith.constant 0.00999999977 : f32
      %35 = vector.broadcast %cst_25 : f32 to vector<16x32xf32>
      %36 = arith.mulf %35, %34 : vector<16x32xf32>
      %37 = arith.maximumf %34, %36 : vector<16x32xf32>
      %38 = arith.truncf %37 : vector<16x32xf32> to vector<16x32xbf16>
      %c0_26 = arith.constant 0 : index
      %c0_27 = arith.constant 0 : index
      %39 = vector.load %arg7[%c0_26, %c0_27] : memref<16x32xbf16, #tpu.memory_space<vmem>>, vector<16x32xbf16>
      tpu.vector_store %arg7[%c0_26, %c0_27], %38 {strides = array<i32>} : memref<16x32xbf16, #tpu.memory_space<vmem>>, vector<16x32xbf16>,
      %cst_28 = arith.constant 0xFF800000 : f32
      %40 = vector.broadcast %cst_28 : f32 to vector<16x1xf32>
      %c0_29 = arith.constant 0 : index
      %c0_30 = arith.constant 0 : index
      %41 = vector.load %arg9[%c0_29, %c0_30] : memref<16x1xf32, #tpu.memory_space<vmem>>, vector<16x1xf32>
      tpu.vector_store %arg9[%c0_29, %c0_30], %40 {strides = array<i32>} : memref<16x1xf32, #tpu.memory_space<vmem>>, vector<16x1xf32>,
      %cst_31 = arith.constant 0.000000e+00 : f32
      %42 = vector.broadcast %cst_31 : f32 to vector<16x1xf32>
      %c0_32 = arith.constant 0 : index
      %c0_33 = arith.constant 0 : index
      %43 = vector.load %arg10[%c0_32, %c0_33] : memref<16x1xf32, #tpu.memory_space<vmem>>, vector<16x1xf32>
      tpu.vector_store %arg10[%c0_32, %c0_33], %42 {strides = array<i32>} : memref<16x1xf32, #tpu.memory_space<vmem>>, vector<16x1xf32>,
    } else {
    }
    %c0 = arith.constant 0 : index
    %c0_1 = arith.constant 0 : index
    %3 = vector.load %arg7[%c0, %c0_1] : memref<16x32xbf16, #tpu.memory_space<vmem>>, vector<16x32xbf16>
    %c0_2 = arith.constant 0 : index
    %c0_3 = arith.constant 0 : index
    %4 = vector.load %arg5[%c0_2, %c0_3] : memref<32x128xbf16, #tpu.memory_space<vmem>>, vector<32x128xbf16>
    %cst = arith.constant dense<0.000000e+00> : vector<16x128xf32>
    %5 = tpu.matmul %3, %4, %cst {dimension_numbers = #tpu.dot_dimension_numbers<[1], [0], [0], [1], [0, 0, 1, 1], [], []>} : vector<16x32xbf16>, vector<32x128xbf16>, vector<16x128xf32> -> vector<16x128xf32>
    %c0_4 = arith.constant 0 : index
    %c0_5 = arith.constant 0 : index
    %6 = vector.load %arg6[%c0_4, %c0_5] : memref<1x128xf32, #tpu.memory_space<vmem>>, vector<1x128xf32>
    %7 = vector.broadcast %6 : vector<1x128xf32> to vector<16x128xf32>
    %8 = arith.addf %5, %7 : vector<16x128xf32>
    %c0_6 = arith.constant 0 : index
    %c0_7 = arith.constant 0 : index
    %9 = vector.load %arg9[%c0_6, %c0_7] : memref<16x1xf32, #tpu.memory_space<vmem>>, vector<16x1xf32>
    %cst_8 = arith.constant dense<0xFF800000> : vector<16xf32>
    %10 = vector.multi_reduction <maximumf>, %8, %cst_8 [1] : vector<16x128xf32> to vector<16xf32>
    %11 = vector.shape_cast %10 : vector<16xf32> to vector<16x1xf32>
    %12 = arith.maximumf %9, %11 : vector<16x1xf32>
    %13 = arith.subf %9, %12 : vector<16x1xf32>
    %14 = math.exp %13 : vector<16x1xf32>
    %c0_9 = arith.constant 0 : index
    %c0_10 = arith.constant 0 : index
    %15 = vector.load %arg10[%c0_9, %c0_10] : memref<16x1xf32, #tpu.memory_space<vmem>>, vector<16x1xf32>
    %16 = arith.mulf %14, %15 : vector<16x1xf32>
    %17 = vector.broadcast %12 : vector<16x1xf32> to vector<16x128xf32>
    %18 = arith.subf %8, %17 : vector<16x128xf32>
    %19 = math.exp %18 : vector<16x128xf32>
    %cst_11 = arith.constant dense<0.000000e+00> : vector<16xf32>
    %20 = vector.multi_reduction <add>, %19, %cst_11 [1] : vector<16x128xf32> to vector<16xf32>
    %21 = vector.shape_cast %20 : vector<16xf32> to vector<16x1xf32>
    %22 = arith.addf %16, %21 : vector<16x1xf32>
    %c0_12 = arith.constant 0 : index
    %c0_13 = arith.constant 0 : index
    %23 = vector.load %arg10[%c0_12, %c0_13] : memref<16x1xf32, #tpu.memory_space<vmem>>, vector<16x1xf32>
    tpu.vector_store %arg10[%c0_12, %c0_13], %22 {strides = array<i32>} : memref<16x1xf32, #tpu.memory_space<vmem>>, vector<16x1xf32>,
    %c0_14 = arith.constant 0 : index
    %c0_15 = arith.constant 0 : index
    %24 = vector.load %arg9[%c0_14, %c0_15] : memref<16x1xf32, #tpu.memory_space<vmem>>, vector<16x1xf32>
    tpu.vector_store %arg9[%c0_14, %c0_15], %12 {strides = array<i32>} : memref<16x1xf32, #tpu.memory_space<vmem>>, vector<16x1xf32>,
    %c0_i32_16 = arith.constant 0 : i32
    %25 = arith.cmpi eq, %arg1, %c0_i32_16 : i32
    %26 = arith.extui %25 : i1 to i32
    %c0_i32_17 = arith.constant 0 : i32
    %27 = arith.cmpi ne, %26, %c0_i32_17 : i32
    scf.if %27 {
      %c0_18 = arith.constant 0 : index
      %c0_19 = arith.constant 0 : index
      %28 = vector.load %arg9[%c0_18, %c0_19] : memref<16x1xf32, #tpu.memory_space<vmem>>, vector<16x1xf32>
      %c0_20 = arith.constant 0 : index
      %c0_21 = arith.constant 0 : index
      %29 = vector.load %arg10[%c0_20, %c0_21] : memref<16x1xf32, #tpu.memory_space<vmem>>, vector<16x1xf32>
      %30 = math.log %29 : vector<16x1xf32>
      %31 = arith.addf %28, %30 : vector<16x1xf32>
      %c0_22 = arith.constant 0 : index
      %c0_23 = arith.constant 0 : index
      %32 = vector.load %arg8[%c0_22, %c0_23] : memref<16x1xf32, #tpu.memory_space<vmem>>, vector<16x1xf32>
      tpu.vector_store %arg8[%c0_22, %c0_23], %31 {strides = array<i32>} : memref<16x1xf32, #tpu.memory_space<vmem>>, vector<16x1xf32>,
    } else {
    }
    return
  }
  func.func @transform_0(%arg0: i32, %arg1: i32) -> (i32, i32) {
    %c0_i32 = arith.constant 0 : i32
    %c0_i32_0 = arith.constant 0 : i32
    return %arg0, %c0_i32 : i32, i32
  }
  func.func @transform_1(%arg0: i32, %arg1: i32) -> (i32, i32) {
    %c0_i32 = arith.constant 0 : i32
    %c0_i32_0 = arith.constant 0 : i32
    %c0_i32_1 = arith.constant 0 : i32
    return %c0_i32, %c0_i32_0 : i32, i32
  }
  func.func @transform_2(%arg0: i32, %arg1: i32) -> (i32, i32) {
    %c0_i32 = arith.constant 0 : i32
    %c0_i32_0 = arith.constant 0 : i32
    %c0_i32_1 = arith.constant 0 : i32
    return %c0_i32, %c0_i32_0 : i32, i32
  }
  func.func @transform_3(%arg0: i32, %arg1: i32) -> (i32, i32) {
    %c0_i32 = arith.constant 0 : i32
    %c0_i32_0 = arith.constant 0 : i32
    return %c0_i32, %arg1 : i32, i32
  }
  func.func @transform_4(%arg0: i32, %arg1: i32) -> (i32, i32) {
    %c0_i32 = arith.constant 0 : i32
    %c0_i32_0 = arith.constant 0 : i32
    return %c0_i32, %arg1 : i32, i32
  }
  func.func @transform_5(%arg0: i32, %arg1: i32) -> (i32, i32) {
    %c0_i32 = arith.constant 0 : i32
    %c0_i32_0 = arith.constant 0 : i32
    return %arg0, %c0_i32 : i32, i32
  }
  func.func @transform_6(%arg0: i32, %arg1: i32) -> (i32, i32) {
    %c0_i32 = arith.constant 0 : i32
    %c0_i32_0 = arith.constant 0 : i32
    return %arg0, %c0_i32 : i32, i32
  }
}

</mosaic_0001>

<llo_original>
// kernel: tpu_custom_call.1
$region0: #{tpu_custom_call.1}
  #allocation0 [shape = 'u32[]', space=smem, size = 0x4, offset = 0x4, fixed_abs, tag = 'smem constant byte address 0x4 - core index']
  #allocation1 [shape = 'u32[144,128]{1,0:T(1,128)}', space=vmem, size = 0x12000, scoped, tag = 'internal scratch']
  #allocation2 [shape = 'f32[16,1]{1,0:T(8,128)}', space=vmem, size = 0x2000, scoped, tag = 'scratch operand']
  #allocation3 [shape = 'f32[16,1]{1,0:T(8,128)}', space=vmem, size = 0x2000, scoped, tag = 'scratch operand']
  %s0 = inlined_call_operand.hbm [shape: f32[16,32], index: 0, kind: input, shape index: {}]
  %s1 = inlined_call_operand.hbm [shape: bf16[32,32], index: 1, kind: input, shape index: {}]
  %s2 = inlined_call_operand.vmem [shape: f32[1,32], index: 2, kind: input, shape index: {}]
  %s3 = inlined_call_operand.hbm [shape: bf16[32,128], index: 3, kind: input, shape index: {}]
  %s4 = inlined_call_operand.vmem [shape: f32[1,128], index: 4, kind: input, shape index: {}]
  %s5 = inlined_call_operand.hbm [shape: bf16[16,32], index: 5, kind: output, shape index: {0}]
  %s6 = inlined_call_operand.vmem [shape: f32[16,1], index: 6, kind: output, shape index: {1}]
  %7 = xla_tuple %s5, %s6
  %s8 = sld [smem:[#allocation0]]
  $region58: #{tpu_custom_call.1} parent=0
    _
  %s10 = ssub.s32 1, %s8
  %s11 = scalar_select 0, %s10, %s8
  $region1: #{tpu_custom_call.1} parent=0
    #allocation4 [shape = 'u8[8192]{0}', space=vmem, size = 0x2000, scoped, tag = 'input window, operand 0, single buffered']
    #allocation5 [shape = 's32[1]{0}', space=sflag, size = 0x4, scoped, tag = 'scoped memory for tpu_custom_call.1']
    #allocation6 [shape = 's32[1]{0}', space=sflag, size = 0x4, scoped, tag = 'scoped memory for tpu_custom_call.1']
    #allocation7 [shape = 'u8[8192]{0}', space=vmem, size = 0x2000, scoped, tag = 'input window, operand 1, single buffered']
    #allocation8 [shape = 's32[1]{0}', space=sflag, size = 0x4, scoped, tag = 'scoped memory for tpu_custom_call.1']
    #allocation9 [shape = 'u8[8192]{0}', space=vmem, size = 0x2000, scoped, tag = 'input window, operand 3, single buffered']
    #allocation10 [shape = 'u8[4096]{0}', space=vmem, size = 0x1000, scoped, tag = 'output window, operand 0, single buffered']
    %12 = vsyncpa [#allocation5], 0
    %13 = vsyncpa [#allocation8], 0
    %14 = vsyncpa [#allocation6], 0
    // Predicated region
    $region2: #{tpu_custom_call.1} parent=1 // pred_check
      _
    $region3: #{tpu_custom_call.1} parent=1 // pred_check_branch
      %16 = sbr.rel (0) target = $region5
    $region4: #{tpu_custom_call.1} parent=1 // pred_region
      %s18 = ssub.s32 256, 256
      %19 = vsyncadd [#allocation5], %s18
      %s20 = sshll.u32 [#allocation4], 4
      %s21 = int_to_ptr.vmem [resolvable:$true] %s20
      %26 = dma.hbm_to_vmem [thread:$0]  %s0, 256, %s21, [#allocation5], 128, 128, 8
    $region5: #{tpu_custom_call.1} parent=1 // pred_fallthru
      _
    // Predicated region
    $region6: #{tpu_custom_call.1} parent=1 // pred_check
      _
    $region7: #{tpu_custom_call.1} parent=1 // pred_check_branch
      %28 = sbr.rel (0) target = $region9
    $region8: #{tpu_custom_call.1} parent=1 // pred_region
      %s30 = ssub.s32 256, 256
      %31 = vsyncadd [#allocation8], %s30
      %s32 = sshll.u32 [#allocation7], 4
      %s33 = int_to_ptr.vmem [resolvable:$true] %s32
      %38 = dma.hbm_to_vmem [thread:$0]  %s1, 256, %s33, [#allocation8], 64, 64, 4
    $region9: #{tpu_custom_call.1} parent=1 // pred_fallthru
      _
    // Predicated region
    $region10: #{tpu_custom_call.1} parent=1 // pred_check
      _
    $region11: #{tpu_custom_call.1} parent=1 // pred_check_branch
      %40 = sbr.rel (0) target = $region13
    $region12: #{tpu_custom_call.1} parent=1 // pred_region
      _
    $region13: #{tpu_custom_call.1} parent=1 // pred_fallthru
      _
    // Predicated region
    $region14: #{tpu_custom_call.1} parent=1 // pred_check
      _
    $region15: #{tpu_custom_call.1} parent=1 // pred_check_branch
      %42 = sbr.rel (0) target = $region17
    $region16: #{tpu_custom_call.1} parent=1 // pred_region
      %s44 = ssub.s32 256, 256
      %45 = vsyncadd [#allocation8], %s44
      %s46 = sshll.u32 [#allocation9], 4
      %s47 = int_to_ptr.vmem [resolvable:$true] %s46
      %52 = dma.hbm_to_vmem [thread:$0]  %s3, 256, %s47, [#allocation8], 64, 64, 4
    $region17: #{tpu_custom_call.1} parent=1 // pred_fallthru
      _
    // Predicated region
    $region18: #{tpu_custom_call.1} parent=1 // pred_check
      _
    $region19: #{tpu_custom_call.1} parent=1 // pred_check_branch
      %54 = sbr.rel (0) target = $region21
    $region20: #{tpu_custom_call.1} parent=1 // pred_region
      _
    $region21: #{tpu_custom_call.1} parent=1 // pred_fallthru
      _
    // Predicated region
    $region22: #{tpu_custom_call.1} parent=1 // pred_check
      _
    $region23: #{tpu_custom_call.1} parent=1 // pred_check_branch
      %56 = sbr.rel (0) target = $region25
    $region24: #{tpu_custom_call.1} parent=1 // pred_region
      %57 = dma.done [#allocation5], 256
    $region25: #{tpu_custom_call.1} parent=1 // pred_fallthru
      _
    // Predicated region
    $region26: #{tpu_custom_call.1} parent=1 // pred_check
      _
    $region27: #{tpu_custom_call.1} parent=1 // pred_check_branch
      %59 = sbr.rel (0) target = $region29
    $region28: #{tpu_custom_call.1} parent=1 // pred_region
      %60 = dma.done [#allocation8], 256
    $region29: #{tpu_custom_call.1} parent=1 // pred_fallthru
      _
    // Predicated region
    $region30: #{tpu_custom_call.1} parent=1 // pred_check
      _
    $region31: #{tpu_custom_call.1} parent=1 // pred_check_branch
      %62 = sbr.rel (0) target = $region33
    $region32: #{tpu_custom_call.1} parent=1 // pred_region
      %63 = dma.done [#allocation8], 256
    $region33: #{tpu_custom_call.1} parent=1 // pred_fallthru
      _
    %p65 = scmp.eq.s32.totalorder 0, 0
    // Predicated region
    $region34: #{tpu_custom_call.1} parent=1 // pred_check
      %p66 = pneg %p65
    $region35: #{tpu_custom_call.1} parent=1 // pred_check_branch
      %68 = sbr.rel (%p66) target = $region37
    $region36: #{tpu_custom_call.1} parent=1 // pred_region
      %v69 = vld [vmem:[#allocation4] sm:$0xff]
      %v70 = vld [vmem:[#allocation4 + $0x8] sm:$0xff]
      %v71 = vpack.c.bf16 %v70, %v69
      %v72 = vld [vmem:[#allocation7] sm:$0xf]
      %v73 = vld [vmem:[#allocation7 + $0x4] sm:$0xf]
      %v74 = vld [vmem:[#allocation7 + $0x8] sm:$0xf]
      %v75 = vld [vmem:[#allocation7 + $0xc] sm:$0xf]
      %v76 = vld [vmem:[%s2] sm:$0x1]
      %v78 = vlaneseq
      %v79 = vshrl.u32 %v78, 7
      %v80 = vsub.s32 0, %v79
      %v81 = vrot.slane %v76, %v80
      %v87 = vunpack.c.l.b16 %v72
      %v88 = vunpack.c.l.b16 %v73
      %v89 = vunpack.c.l.b16 %v74
      %v90 = vunpack.c.l.b16 %v75
      %v91 = vpack.c.b16 %v88, %v87
      %v92 = vpack.c.b16 %v90, %v89
      %vm95 = vcmask 261120
      %v97 = vsel %vm95, %v71, 0
      %99 = vmatprep.subr.bf16.mxu0 0
      %100 = vmatpush1.bf16.msra.mxu0 %v91
      %101 = vmatprep.subr.bf16.mxu0 0
      %102 = vmatpush1.bf16.msra.mxu0 %v92
      %103 = vmatprep.subr.bf16.mxu0 0
      %104 = vmatpush1.bf16.msra.mxu0 0
      %105 = vmatprep.subr.bf16.mxu0 0
      %106 = vmatpush1.bf16.msra.mxu0 0
      %107 = vmatprep.subr.bf16.mxu0 0
      %108 = vmatpush1.bf16.msra.mxu0 0
      %109 = vmatprep.subr.bf16.mxu0 0
      %110 = vmatpush1.bf16.msra.mxu0 0
      %111 = vmatprep.subr.bf16.mxu0 0
      %112 = vmatpush1.bf16.msra.mxu0 0
      %113 = vmatprep.subr.bf16.mxu0 0
      %114 = vmatpush1.bf16.msra.mxu0 0
      %115 = vmatprep.subr.bf16.mxu0 0
      %116 = vmatpush1.bf16.msra.mxu0 0
      %117 = vmatprep.subr.bf16.mxu0 0
      %118 = vmatpush1.bf16.msra.mxu0 0
      %119 = vmatprep.subr.bf16.mxu0 0
      %120 = vmatpush1.bf16.msra.mxu0 0
      %121 = vmatprep.subr.bf16.mxu0 0
      %122 = vmatpush1.bf16.msra.mxu0 0
      %123 = vmatprep.subr.bf16.mxu0 0
      %124 = vmatpush1.bf16.msra.mxu0 0
      %125 = vmatprep.subr.bf16.mxu0 0
      %126 = vmatpush1.bf16.msra.mxu0 0
      %127 = vmatprep.subr.bf16.mxu0 0
      %128 = vmatpush1.bf16.msra.mxu0 0
      %129 = vmatprep.subr.bf16.mxu0 0
      %130 = vmatpush1.bf16.msra.mxu0 0
      %131 = vmatprep.mubr.bf16.mxu0 0
      %132 = vmatmul.mubr.bf16.gmra.mrb[0].mxu0 %v97
      %v133 = vpop.f32.mrb[0].mxu0
      %v134 = vadd.f32 %v81, %v133
      %v135 = vpop.f32.mrb[0].mxu0
      %v136 = vpop.f32.mrb[0].mxu0
      %v137 = vadd.f32 %v81, %v136
      %v138 = vpop.f32.mrb[0].mxu0
      %139 = vdwg.mxu0
      %v140 = vmul.f32 %v134, 0.01
      %v141 = vmul.f32 %v137, 0.01
      %v142 = vmax.f32 %v134, %v140
      %v143 = vmax.f32 %v137, %v141
      %v144 = vpack.c.bf16 %v143, %v142
      %v146 = vunpack.c.l.b16 %v144
      %v147 = vunpack.c.h.b16 %v144
      %v148 = vpack.c.b16 %v146, %v146
      %v149 = vpack.c.b16 %v147, %v147
      %vm152 = vcmask 257024
      %153 = vst.msk [vmem:[#allocation10] sm:$0xf] %vm152, %v148
      %154 = vst.msk [vmem:[#allocation10 + $0x4] sm:$0xf] %vm152, %v149
      %vm155 = vcmask 7168
      %156 = vst.msk [vmem:[#allocation2] sm:$0xff] %vm155, -inf
      %157 = vst.msk [vmem:[#allocation2 + $0x8] sm:$0xff] %vm155, -inf
      %158 = vst.msk [vmem:[#allocation3] sm:$0xff] %vm155, 0.0
      %159 = vst.msk [vmem:[#allocation3 + $0x8] sm:$0xff] %vm155, 0.0
    $region37: #{tpu_custom_call.1} parent=1 // pred_fallthru
      _
    %v160 = vld [vmem:[#allocation10] sm:$0xf]
    %v161 = vld [vmem:[#allocation10 + $0x4] sm:$0xf]
    %v162 = vld [vmem:[#allocation9] sm:$0xf]
    %v163 = vld [vmem:[#allocation9 + $0x4] sm:$0xf]
    %v164 = vld [vmem:[#allocation9 + $0x8] sm:$0xf]
    %v165 = vld [vmem:[#allocation9 + $0xc] sm:$0xf]
    %v166 = vld [vmem:[%s4] sm:$0x1]
    %v168 = vlaneseq
    %v169 = vshrl.u32 %v168, 7
    %v170 = vsub.s32 0, %v169
    %v171 = vrot.slane %v166, %v170
    %v175 = vunpack.c.l.b16 %v160
    %v176 = vunpack.c.l.b16 %v161
    %v177 = vpack.c.b16 %v176, %v175
    %v182 = vunpack.c.l.b16 %v162
    %v183 = vunpack.c.l.b16 %v163
    %v184 = vunpack.c.l.b16 %v164
    %v185 = vunpack.c.l.b16 %v165
    %v186 = vpack.c.b16 %v183, %v182
    %v187 = vpack.c.b16 %v185, %v184
    %vm190 = vcmask 261120
    %v192 = vsel %vm190, %v177, 0
    %194 = vmatprep.subr.bf16.mxu0 0
    %195 = vmatpush1.bf16.msra.mxu0 %v186
    %196 = vmatprep.subr.bf16.mxu0 0
    %197 = vmatpush1.bf16.msra.mxu0 %v187
    %198 = vmatprep.subr.bf16.mxu0 0
    %199 = vmatpush1.bf16.msra.mxu0 0
    %200 = vmatprep.subr.bf16.mxu0 0
    %201 = vmatpush1.bf16.msra.mxu0 0
    %202 = vmatprep.subr.bf16.mxu0 0
    %203 = vmatpush1.bf16.msra.mxu0 0
    %204 = vmatprep.subr.bf16.mxu0 0
    %205 = vmatpush1.bf16.msra.mxu0 0
    %206 = vmatprep.subr.bf16.mxu0 0
    %207 = vmatpush1.bf16.msra.mxu0 0
    %208 = vmatprep.subr.bf16.mxu0 0
    %209 = vmatpush1.bf16.msra.mxu0 0
    %210 = vmatprep.subr.bf16.mxu0 0
    %211 = vmatpush1.bf16.msra.mxu0 0
    %212 = vmatprep.subr.bf16.mxu0 0
    %213 = vmatpush1.bf16.msra.mxu0 0
    %214 = vmatprep.subr.bf16.mxu0 0
    %215 = vmatpush1.bf16.msra.mxu0 0
    %216 = vmatprep.subr.bf16.mxu0 0
    %217 = vmatpush1.bf16.msra.mxu0 0
    %218 = vmatprep.subr.bf16.mxu0 0
    %219 = vmatpush1.bf16.msra.mxu0 0
    %220 = vmatprep.subr.bf16.mxu0 0
    %221 = vmatpush1.bf16.msra.mxu0 0
    %222 = vmatprep.subr.bf16.mxu0 0
    %223 = vmatpush1.bf16.msra.mxu0 0
    %224 = vmatprep.subr.bf16.mxu0 0
    %225 = vmatpush1.bf16.msra.mxu0 0
    %226 = vmatprep.mubr.bf16.mxu0 0
    %227 = vmatmul.mubr.bf16.gmra.mrb[0].mxu0 %v192
    %v228 = vpop.f32.mrb[0].mxu0
    %v229 = vadd.f32 %v171, %v228
    %v230 = vpop.f32.mrb[0].mxu0
    %v231 = vpop.f32.mrb[0].mxu0
    %v232 = vadd.f32 %v171, %v231
    %v233 = vpop.f32.mrb[0].mxu0
    %234 = vdwg.mxu0
    %v235 = vld [vmem:[#allocation2] sm:$0xff]
    %v236 = vld [vmem:[#allocation2 + $0x8] sm:$0xff]
    %237 = vmax.xlane.f32.xlu0 %v229
    %v238 = vpop.xlane.xlu0 %237
    %239 = vmax.xlane.f32.xlu0 %v232
    %v240 = vpop.xlane.xlu0 %239
    %v241 = vmax.f32 %v235, %v238
    %v242 = vmax.f32 %v236, %v240
    %v243 = vsub.f32 %v235, %v241
    %v244 = vsub.f32 %v236, %v242
    %v245 = vmul.f32 %v243, 1.442695
    %v246 = vpow.pop %v245
    %v247 = vmul.f32 %v244, 1.442695
    %v248 = vpow.pop %v247
    %v249 = vld [vmem:[#allocation3] sm:$0xff]
    %v250 = vld [vmem:[#allocation3 + $0x8] sm:$0xff]
    %v251 = vmul.f32 %v246, %v249
    %v252 = vmul.f32 %v248, %v250
    %254 = vset.pattern.permute.xlu0 0
    %255 = vperm.xlu0 %254, %v241
    %v256 = vpop.permute.xlu0 %255
    %259 = vset.pattern.permute.xlu0 0
    %260 = vperm.xlu0 %259, %v242
    %v261 = vpop.permute.xlu0 %260
    %v263 = vsub.f32 %v229, %v256
    %v264 = vsub.f32 %v232, %v261
    %v265 = vmul.f32 %v263, 1.442695
    %v266 = vpow.pop %v265
    %v267 = vmul.f32 %v264, 1.442695
    %v268 = vpow.pop %v267
    %269 = vadd.xlane.f32.xlu0 %v266
    %v270 = vpop.xlane.xlu0 %269
    %271 = vadd.xlane.f32.xlu0 %v268
    %v272 = vpop.xlane.xlu0 %271
    %v273 = vadd.f32 %v251, %v270
    %v274 = vadd.f32 %v252, %v272
    %vm275 = vcmask 7168
    %276 = vst.msk [vmem:[#allocation3] sm:$0xff] %vm275, %v273
    %277 = vst.msk [vmem:[#allocation3 + $0x8] sm:$0xff] %vm275, %v274
    %278 = vst.msk [vmem:[#allocation2] sm:$0xff] %vm275, %v241
    %279 = vst.msk [vmem:[#allocation2 + $0x8] sm:$0xff] %vm275, %v242
    // Predicated region
    $region38: #{tpu_custom_call.1} parent=1 // pred_check
      %p280 = pneg %p65
    $region39: #{tpu_custom_call.1} parent=1 // pred_check_branch
      %282 = sbr.rel (%p280) target = $region41
    $region40: #{tpu_custom_call.1} parent=1 // pred_region
      %v283 = vld [vmem:[#allocation2] sm:$0xff]
      %v284 = vld [vmem:[#allocation2 + $0x8] sm:$0xff]
      %v285 = vld [vmem:[#allocation3] sm:$0xff]
      %v286 = vld [vmem:[#allocation3 + $0x8] sm:$0xff]
      %v287 = vlog2.pop %v285
      %v288 = vmul.f32 %v287, 0.6931472
      %v289 = vlog2.pop %v286
      %v290 = vmul.f32 %v289, 0.6931472
      %v291 = vadd.f32 %v283, %v288
      %v292 = vadd.f32 %v284, %v290
      %293 = vst.msk [vmem:[%s6] sm:$0xff] %vm275, %v291
      %294 = vst.msk [vmem:[%s6 + $0x8] sm:$0xff] %vm275, %v292
    $region41: #{tpu_custom_call.1} parent=1 // pred_fallthru
      _
    // Predicated region
    $region42: #{tpu_custom_call.1} parent=1 // pred_check
      _
    $region43: #{tpu_custom_call.1} parent=1 // pred_check_branch
      %296 = sbr.rel (0) target = $region45
    $region44: #{tpu_custom_call.1} parent=1 // pred_region
      %s298 = ssub.s32 128, 128
      %299 = vsyncadd [#allocation6], %s298
      %s300 = sshll.u32 [#allocation10], 4
      %s301 = int_to_ptr.vmem [resolvable:$true] %s300
      %306 = dma.vmem_to_hbm [thread:$0]  %s301, 128, %s5, [#allocation6], 64, 64, 4
    $region45: #{tpu_custom_call.1} parent=1 // pred_fallthru
      _
    // Predicated region
    $region46: #{tpu_custom_call.1} parent=1 // pred_check
      _
    $region47: #{tpu_custom_call.1} parent=1 // pred_check_branch
      %308 = sbr.rel (0) target = $region49
    $region48: #{tpu_custom_call.1} parent=1 // pred_region
      _
    $region49: #{tpu_custom_call.1} parent=1 // pred_fallthru
      _
    // Predicated region
    $region50: #{tpu_custom_call.1} parent=1 // pred_check
      _
    $region51: #{tpu_custom_call.1} parent=1 // pred_check_branch
      %310 = sbr.rel (0) target = $region53
    $region52: #{tpu_custom_call.1} parent=1 // pred_region
      %311 = dma.done [#allocation6], 128
    $region53: #{tpu_custom_call.1} parent=1 // pred_fallthru
      _
    // Predicated region
    $region54: #{tpu_custom_call.1} parent=1 // pred_check
      _
    $region55: #{tpu_custom_call.1} parent=1 // pred_check_branch
      %313 = sbr.rel (0) target = $region57
    $region56: #{tpu_custom_call.1} parent=1 // pred_region
      _
    $region57: #{tpu_custom_call.1} parent=1 // pred_fallthru
      _
    %314 = vsyncpa [#allocation5], 1
    %315 = vsyncpa [#allocation8], 1
    %316 = vsyncpa [#allocation6], 1

</llo_original>
